<compile_context>
chip_gen: v6e
topology: v6e:2x2x1
jax: 0.10.0
libtpu: 0.0.40
codegen_flags: <defaults>
</compile_context>

<pallas_src>
import functools

import jax
import jax.numpy as jnp
from jax import lax
from jax.experimental import pallas as pl
from jax.experimental.pallas import tpu as pltpu


def _round_up(x, m):
    return ((x + m - 1) // m) * m


def _lightgcn_kernel(a_ref, x_ref, w_ref, d_row_ref, d_col_ref, o_ref, acc_ref,
                     *, compute_dtype):
    """One (row-tile i, reduction-tile k) grid step of (d ⊙ (A @ (d ⊙ X))) @ W.

    a_ref:     (tm, tk)           tile of the dense adjacency
    x_ref:     (tk, C_in_p)       row panel of the padded node features
    w_ref:     (C_in_p, C_out_p)  full padded GCN linear weight
    d_row_ref: (tm, 1)            D^{-1/2} for this output row block
    d_col_ref: (tk, 1)            D^{-1/2} for the contracted (source) rows
    o_ref:     (tm, C_out_p)      lane-dense output tile
    acc_ref:   (tm, C_in_p)       f32 accumulator for A @ (d ⊙ X)
    """
    k = pl.program_id(1)

    @pl.when(k == 0)
    def _():
        acc_ref[...] = jnp.zeros_like(acc_ref)

    # Fold the "column" half of the normalization into the X operand, then one
    # MXU matmul with the raw A tile (no A_hat temporary).
    x_scaled = (d_col_ref[...] * x_ref[...]).astype(compute_dtype)
    a_tile = a_ref[...].astype(compute_dtype)
    acc_ref[...] += jnp.dot(a_tile, x_scaled, preferred_element_type=jnp.float32)

    @pl.when(k == pl.num_programs(1) - 1)
    def _():
        # "Row" half of the normalization, then the (small) linear transform.
        h = (d_row_ref[...] * acc_ref[...]).astype(compute_dtype)
        o_ref[...] = jnp.dot(h, w_ref[...].astype(compute_dtype),
                             preferred_element_type=jnp.float32).astype(o_ref.dtype)


def lightgcn_forward(a, x, w, *, tile_n=256, compute_dtype=jnp.float32):
    """out = D^{-1/2} A D^{-1/2} (X W), computed as (d ⊙ (A @ (d ⊙ X))) @ W."""
    n, c_in = x.shape
    c_out = w.shape[1]

    # Lane-dense padding: channel dims to multiples of 128, N to a multiple of
    # the adjacency tile size.
    tile = min(tile_n, _round_up(n, 128))
    n_pad = _round_up(n, tile)
    c_in_pad = _round_up(c_in, 128)
    c_out_pad = _round_up(c_out, 128)

    a_p = jnp.zeros((n_pad, n_pad), jnp.float32).at[:n, :n].set(a.astype(jnp.float32))
    x_p = jnp.zeros((n_pad, c_in_pad), jnp.float32).at[:n, :c_in].set(x.astype(jnp.float32))
    w_p = jnp.zeros((c_in_pad, c_out_pad), jnp.float32).at[:c_in, :c_out].set(w.astype(jnp.float32))

    # Precompute D^{-1/2} once (A is symmetric -> row deg == col deg).
    # Zero-degree and padded rows map to d = 0, so they contribute nothing.
    deg = jnp.sum(a.astype(jnp.float32), axis=1)
    d = jnp.where(deg > 0, lax.rsqrt(deg), 0.0)
    d_p = jnp.zeros((n_pad, 1), jnp.float32).at[:n, 0].set(d)

    grid = (n_pad // tile, n_pad // tile)
    kernel = functools.partial(_lightgcn_kernel, compute_dtype=compute_dtype)

    out_p = pl.pallas_call(
        kernel,
        out_shape=jax.ShapeDtypeStruct((n_pad, c_out_pad), jnp.float32),
        grid_spec=pltpu.PrefetchScalarGridSpec(
            num_scalar_prefetch=0,
            grid=grid,
            in_specs=[
                pl.BlockSpec((tile, tile), lambda i, k: (i, k)),           # A tile
                pl.BlockSpec((tile, c_in_pad), lambda i, k: (k, 0)),       # X panel
                pl.BlockSpec((c_in_pad, c_out_pad), lambda i, k: (0, 0)),  # W (whole)
                pl.BlockSpec((tile, 1), lambda i, k: (i, 0)),              # d (rows)
                pl.BlockSpec((tile, 1), lambda i, k: (k, 0)),              # d (cols)
            ],
            out_specs=pl.BlockSpec((tile, c_out_pad), lambda i, k: (i, 0)),
            scratch_shapes=[pltpu.VMEM((tile, c_in_pad), jnp.float32)],
        ),
        compiler_params=pltpu.CompilerParams(
            dimension_semantics=("parallel", "arbitrary")),
    )(a_p, x_p, w_p, d_p, d_p)

    return out_p[:n, :c_out]


def lightgcn_reference(a, x, w):
    """Pure-JAX reference: A_hat @ (X @ W)."""
    deg = jnp.sum(a, axis=1)
    d = jnp.where(deg > 0, 1.0 / jnp.sqrt(deg), 0.0)
    a_hat = d[:, None] * a * d[None, :]
    xw = jnp.dot(x, w, precision=lax.Precision.HIGHEST)
    return jnp.dot(a_hat, xw, precision=lax.Precision.HIGHEST)


if __name__ == "__main__":
    # ---- Test 1: the graph from the PyTorch script (10 nodes, one-hot feats) ----
    edges = [(0, 5), (0, 6), (1, 6), (1, 7), (2, 7),
             (2, 8), (3, 8), (3, 9), (4, 9), (4, 5)]
    edges = edges + [(j, i) for i, j in edges]
    src = jnp.array([e[0] for e in edges], dtype=jnp.int32)
    dst = jnp.array([e[1] for e in edges], dtype=jnp.int32)
    n = 10
    # Dense adjacency: A[i, j] = 1 iff there is a message edge j -> i.
    a = jnp.zeros((n, n), jnp.float32).at[dst, src].add(1.0)

    in_channels, out_channels = n, 16
    x = jnp.eye(n, dtype=jnp.float32)                       # x = torch.eye(10)

    key = jax.random.PRNGKey(0)
    k_w, k_rest = jax.random.split(key)
    w = jax.random.normal(k_w, (in_channels, out_channels), jnp.float32) * 0.1

    out = jax.block_until_ready(lightgcn_forward(a, x, w))
    ref = lightgcn_reference(a, x, w)
    assert out.shape == (n, out_channels)
    assert jnp.allclose(out, ref, atol=1e-4, rtol=1e-4), "mismatch vs JAX reference (test 1)"

    # ---- Test 2: larger random symmetric graph exercising the multi-tile grid ----
    n2, c_in2, c_out2 = 300, 48, 64
    k_m, k_x2, k_w2 = jax.random.split(k_rest, 3)
    m = (jax.random.uniform(k_m, (n2, n2)) < 0.05).astype(jnp.float32)
    a2 = jnp.maximum(m, m.T) * (1.0 - jnp.eye(n2, dtype=jnp.float32))
    x2 = jax.random.normal(k_x2, (n2, c_in2), jnp.float32)
    w2 = jax.random.normal(k_w2, (c_in2, c_out2), jnp.float32) * 0.1

    out2 = jax.block_until_ready(lightgcn_forward(a2, x2, w2, tile_n=128))
    ref2 = lightgcn_reference(a2, x2, w2)
    assert out2.shape == (n2, c_out2)
    assert jnp.allclose(out2, ref2, atol=1e-3, rtol=1e-3), "mismatch vs JAX reference (test 2)"

    print("KERNEL_OK")
</pallas_src>

<mosaic_0001>
module attributes {stable_mosaic.version = 11 : i64} {
  func.func @_lightgcn_kernel(%arg0: i32, %arg1: i32, %arg2: memref<128x128xf32, #tpu.memory_space<vmem>>, %arg3: memref<128x128xf32, #tpu.memory_space<vmem>>, %arg4: memref<128x128xf32, #tpu.memory_space<vmem>>, %arg5: memref<128x1xf32, #tpu.memory_space<vmem>>, %arg6: memref<128x1xf32, #tpu.memory_space<vmem>>, %arg7: memref<128x128xf32, #tpu.memory_space<vmem>>, %arg8: memref<128x128xf32, #tpu.memory_space<vmem>>) attributes {dimension_semantics = [#tpu.dimension_semantics<parallel>, #tpu.dimension_semantics<arbitrary>], iteration_bounds = array<i64: 1, 1>, scalar_prefetch = 0 : i64, scratch_operands = 1 : i64, tpu.core_type = #tpu.core_type<tc>, window_params = [{transform_indices = @transform_0, window_bounds = array<i64: 128, 128>}, {transform_indices = @transform_1, window_bounds = array<i64: 128, 128>}, {pipeline_mode = #tpu.pipeline_mode<synchronous>, transform_indices = @transform_2, window_bounds = array<i64: 128, 128>}, {transform_indices = @transform_3, window_bounds = array<i64: 128, 1>}, {transform_indices = @transform_4, window_bounds = array<i64: 128, 1>}, {transform_indices = @transform_5, window_bounds = array<i64: 128, 128>}]} {
    %c0_i32 = arith.constant 0 : i32
    %0 = arith.cmpi eq, %arg1, %c0_i32 : i32
    %1 = arith.extui %0 : i1 to i32
    %c0_i32_0 = arith.constant 0 : i32
    %2 = arith.cmpi ne, %1, %c0_i32_0 : i32
    scf.if %2 {
      %cst_12 = arith.constant 0.000000e+00 : f32
      %15 = vector.broadcast %cst_12 : f32 to vector<128x128xf32>
      %c0_13 = arith.constant 0 : index
      %c0_14 = arith.constant 0 : index
      %16 = vector.load %arg8[%c0_13, %c0_14] : memref<128x128xf32, #tpu.memory_space<vmem>>, vector<128x128xf32>
      tpu.vector_store %arg8[%c0_13, %c0_14], %15 {strides = array<i32>} : memref<128x128xf32, #tpu.memory_space<vmem>>, vector<128x128xf32>,
    } else {
    }
    %c0 = arith.constant 0 : index
    %c0_1 = arith.constant 0 : index
    %3 = vector.load %arg6[%c0, %c0_1] : memref<128x1xf32, #tpu.memory_space<vmem>>, vector<128x1xf32>
    %c0_2 = arith.constant 0 : index
    %c0_3 = arith.constant 0 : index
    %4 = vector.load %arg3[%c0_2, %c0_3] : memref<128x128xf32, #tpu.memory_space<vmem>>, vector<128x128xf32>
    %5 = vector.broadcast %3 : vector<128x1xf32> to vector<128x128xf32>
    %6 = arith.mulf %5, %4 : vector<128x128xf32>
    %c0_4 = arith.constant 0 : index
    %c0_5 = arith.constant 0 : index
    %7 = vector.load %arg2[%c0_4, %c0_5] : memref<128x128xf32, #tpu.memory_space<vmem>>, vector<128x128xf32>
    %c0_6 = arith.constant 0 : index
    %c0_7 = arith.constant 0 : index
    %8 = vector.load %arg8[%c0_6, %c0_7] : memref<128x128xf32, #tpu.memory_space<vmem>>, vector<128x128xf32>
    %cst = arith.constant dense<0.000000e+00> : vector<128x128xf32>
    %9 = tpu.matmul %7, %6, %cst {dimension_numbers = #tpu.dot_dimension_numbers<[1], [0], [0], [1], [0, 0, 1, 1], [], []>} : vector<128x128xf32>, vector<128x128xf32>, vector<128x128xf32> -> vector<128x128xf32>
    %10 = arith.addf %8, %9 : vector<128x128xf32>
    %c0_8 = arith.constant 0 : index
    %c0_9 = arith.constant 0 : index
    %11 = vector.load %arg8[%c0_8, %c0_9] : memref<128x128xf32, #tpu.memory_space<vmem>>, vector<128x128xf32>
    tpu.vector_store %arg8[%c0_8, %c0_9], %10 {strides = array<i32>} : memref<128x128xf32, #tpu.memory_space<vmem>>, vector<128x128xf32>,
    %c0_i32_10 = arith.constant 0 : i32
    %12 = arith.cmpi eq, %arg1, %c0_i32_10 : i32
    %13 = arith.extui %12 : i1 to i32
    %c0_i32_11 = arith.constant 0 : i32
    %14 = arith.cmpi ne, %13, %c0_i32_11 : i32
    scf.if %14 {
      %c0_12 = arith.constant 0 : index
      %c0_13 = arith.constant 0 : index
      %15 = vector.load %arg5[%c0_12, %c0_13] : memref<128x1xf32, #tpu.memory_space<vmem>>, vector<128x1xf32>
      %c0_14 = arith.constant 0 : index
      %c0_15 = arith.constant 0 : index
      %16 = vector.load %arg8[%c0_14, %c0_15] : memref<128x128xf32, #tpu.memory_space<vmem>>, vector<128x128xf32>
      %17 = vector.broadcast %15 : vector<128x1xf32> to vector<128x128xf32>
      %18 = arith.mulf %17, %16 : vector<128x128xf32>
      %c0_16 = arith.constant 0 : index
      %c0_17 = arith.constant 0 : index
      %19 = vector.load %arg4[%c0_16, %c0_17] : memref<128x128xf32, #tpu.memory_space<vmem>>, vector<128x128xf32>
      %cst_18 = arith.constant dense<0.000000e+00> : vector<128x128xf32>
      %20 = tpu.matmul %18, %19, %cst_18 {dimension_numbers = #tpu.dot_dimension_numbers<[1], [0], [0], [1], [0, 0, 1, 1], [], []>} : vector<128x128xf32>, vector<128x128xf32>, vector<128x128xf32> -> vector<128x128xf32>
      %c0_19 = arith.constant 0 : index
      %c0_20 = arith.constant 0 : index
      %21 = vector.load %arg7[%c0_19, %c0_20] : memref<128x128xf32, #tpu.memory_space<vmem>>, vector<128x128xf32>
      tpu.vector_store %arg7[%c0_19, %c0_20], %20 {strides = array<i32>} : memref<128x128xf32, #tpu.memory_space<vmem>>, vector<128x128xf32>,
    } else {
    }
    return
  }
  func.func @transform_0(%arg0: i32, %arg1: i32) -> (i32, i32) {
    %c0_i32 = arith.constant 0 : i32
    return %arg0, %arg1 : i32, i32
  }
  func.func @transform_1(%arg0: i32, %arg1: i32) -> (i32, i32) {
    %c0_i32 = arith.constant 0 : i32
    %c0_i32_0 = arith.constant 0 : i32
    return %arg1, %c0_i32 : i32, i32
  }
  func.func @transform_2(%arg0: i32, %arg1: i32) -> (i32, i32) {
    %c0_i32 = arith.constant 0 : i32
    %c0_i32_0 = arith.constant 0 : i32
    %c0_i32_1 = arith.constant 0 : i32
    return %c0_i32, %c0_i32_0 : i32, i32
  }
  func.func @transform_3(%arg0: i32, %arg1: i32) -> (i32, i32) {
    %c0_i32 = arith.constant 0 : i32
    %c0_i32_0 = arith.constant 0 : i32
    return %arg0, %c0_i32 : i32, i32
  }
  func.func @transform_4(%arg0: i32, %arg1: i32) -> (i32, i32) {
    %c0_i32 = arith.constant 0 : i32
    %c0_i32_0 = arith.constant 0 : i32
    return %arg1, %c0_i32 : i32, i32
  }
  func.func @transform_5(%arg0: i32, %arg1: i32) -> (i32, i32) {
    %c0_i32 = arith.constant 0 : i32
    %c0_i32_0 = arith.constant 0 : i32
    return %arg0, %c0_i32 : i32, i32
  }
}

</mosaic_0001>

<llo_original>
// kernel: tpu_custom_call.1
$region0: #{tpu_custom_call.1}
  #allocation0 [shape = 'u32[]', space=smem, size = 0x4, offset = 0x4, fixed_abs, tag = 'smem constant byte address 0x4 - core index']
  #allocation1 [shape = 'u32[144,128]{1,0:T(1,128)}', space=vmem, size = 0x12000, scoped, tag = 'internal scratch']
  #allocation2 [shape = 'f32[128,128]{1,0:T(8,128)}', space=vmem, size = 0x10000, scoped, tag = 'scratch operand']
  %s0 = inlined_call_operand.vmem [shape: f32[128,128], index: 0, kind: input, shape index: {}]
  %s1 = inlined_call_operand.vmem [shape: f32[128,128], index: 1, kind: input, shape index: {}]
  %s2 = inlined_call_operand.hbm [shape: f32[128,128], index: 2, kind: input, shape index: {}]
  %s3 = inlined_call_operand.vmem [shape: f32[128,1], index: 3, kind: input, shape index: {}]
  %s4 = inlined_call_operand.vmem [shape: f32[128,1], index: 4, kind: input, shape index: {}]
  %s5 = inlined_call_operand.hbm [shape: f32[128,128], index: 5, kind: output, shape index: {}]
  %s6 = sld [smem:[#allocation0]]
  $region42: #{tpu_custom_call.1} parent=0
    _
  %s8 = ssub.s32 1, %s6
  %s9 = scalar_select 0, %s8, %s6
  $region1: #{tpu_custom_call.1} parent=0
    #allocation3 [shape = 'u8[65536]{0}', space=vmem, size = 0x10000, scoped, tag = 'input window, operand 2, single buffered']
    #allocation4 [shape = 's32[1]{0}', space=sflag, size = 0x4, scoped, tag = 'scoped memory for tpu_custom_call.1']
    #allocation5 [shape = 's32[1]{0}', space=sflag, size = 0x4, scoped, tag = 'scoped memory for tpu_custom_call.1']
    #allocation6 [shape = 'u8[65536]{0}', space=vmem, size = 0x10000, scoped, tag = 'output window, operand 0, single buffered']
    %10 = vsyncpa [#allocation4], 0
    %11 = vsyncpa [#allocation5], 0
    // Predicated region
    $region2: #{tpu_custom_call.1} parent=1 // pred_check
      _
    $region3: #{tpu_custom_call.1} parent=1 // pred_check_branch
      %13 = sbr.rel (0) target = $region5
    $region4: #{tpu_custom_call.1} parent=1 // pred_region
      _
    $region5: #{tpu_custom_call.1} parent=1 // pred_fallthru
      _
    // Predicated region
    $region6: #{tpu_custom_call.1} parent=1 // pred_check
      _
    $region7: #{tpu_custom_call.1} parent=1 // pred_check_branch
      %15 = sbr.rel (0) target = $region9
    $region8: #{tpu_custom_call.1} parent=1 // pred_region
      _
    $region9: #{tpu_custom_call.1} parent=1 // pred_fallthru
      _
    // Predicated region
    $region10: #{tpu_custom_call.1} parent=1 // pred_check
      _
    $region11: #{tpu_custom_call.1} parent=1 // pred_check_branch
      %17 = sbr.rel (0) target = $region13
    $region12: #{tpu_custom_call.1} parent=1 // pred_region
      %s19 = ssub.s32 2048, 2048
      %20 = vsyncadd [#allocation4], %s19
      %s21 = sshll.u32 [#allocation3], 4
      %s22 = int_to_ptr.vmem [resolvable:$true] %s21
      %27 = dma.hbm_to_vmem [thread:$0]  %s2, 2048, %s22, [#allocation4], 128, 128, 8
    $region13: #{tpu_custom_call.1} parent=1 // pred_fallthru
      _
    // Predicated region
    $region14: #{tpu_custom_call.1} parent=1 // pred_check
      _
    $region15: #{tpu_custom_call.1} parent=1 // pred_check_branch
      %29 = sbr.rel (0) target = $region17
    $region16: #{tpu_custom_call.1} parent=1 // pred_region
      _
    $region17: #{tpu_custom_call.1} parent=1 // pred_fallthru
      _
    // Predicated region
    $region18: #{tpu_custom_call.1} parent=1 // pred_check
      _
    $region19: #{tpu_custom_call.1} parent=1 // pred_check_branch
      %31 = sbr.rel (0) target = $region21
    $region20: #{tpu_custom_call.1} parent=1 // pred_region
      _
    $region21: #{tpu_custom_call.1} parent=1 // pred_fallthru
      _
    // Predicated region
    $region22: #{tpu_custom_call.1} parent=1 // pred_check
      _
    $region23: #{tpu_custom_call.1} parent=1 // pred_check_branch
      %33 = sbr.rel (0) target = $region25
    $region24: #{tpu_custom_call.1} parent=1 // pred_region
      %34 = dma.done [#allocation4], 2048
    $region25: #{tpu_custom_call.1} parent=1 // pred_fallthru
      _
    %p35 = scmp.eq.s32.totalorder 0, 0
    // Predicated region
    $region26: #{tpu_custom_call.1} parent=1 // pred_check
      %p36 = pneg %p35
    $region27: #{tpu_custom_call.1} parent=1 // pred_check_branch
      %38 = sbr.rel (%p36) target = $region29
    $region28: #{tpu_custom_call.1} parent=1 // pred_region
      %39 = vst [vmem:[#allocation2] sm:$0xff] 0.0
      %40 = vst [vmem:[#allocation2 + $0x8] sm:$0xff] 0.0
      %41 = vst [vmem:[#allocation2 + $0x10] sm:$0xff] 0.0
      %42 = vst [vmem:[#allocation2 + $0x18] sm:$0xff] 0.0
      %43 = vst [vmem:[#allocation2 + $0x20] sm:$0xff] 0.0
      %44 = vst [vmem:[#allocation2 + $0x28] sm:$0xff] 0.0
      %45 = vst [vmem:[#allocation2 + $0x30] sm:$0xff] 0.0
      %46 = vst [vmem:[#allocation2 + $0x38] sm:$0xff] 0.0
      %47 = vst [vmem:[#allocation2 + $0x40] sm:$0xff] 0.0
      %48 = vst [vmem:[#allocation2 + $0x48] sm:$0xff] 0.0
      %49 = vst [vmem:[#allocation2 + $0x50] sm:$0xff] 0.0
      %50 = vst [vmem:[#allocation2 + $0x58] sm:$0xff] 0.0
      %51 = vst [vmem:[#allocation2 + $0x60] sm:$0xff] 0.0
      %52 = vst [vmem:[#allocation2 + $0x68] sm:$0xff] 0.0
      %53 = vst [vmem:[#allocation2 + $0x70] sm:$0xff] 0.0
      %54 = vst [vmem:[#allocation2 + $0x78] sm:$0xff] 0.0
    $region29: #{tpu_custom_call.1} parent=1 // pred_fallthru
      _
    %v55 = vld [vmem:[%s4] sm:$0xff]
    %v56 = vld [vmem:[%s4 + $0x8] sm:$0xff]
    %v57 = vld [vmem:[%s4 + $0x10] sm:$0xff]
    %v58 = vld [vmem:[%s4 + $0x18] sm:$0xff]
    %v59 = vld [vmem:[%s4 + $0x20] sm:$0xff]
    %v60 = vld [vmem:[%s4 + $0x28] sm:$0xff]
    %v61 = vld [vmem:[%s4 + $0x30] sm:$0xff]
    %v62 = vld [vmem:[%s4 + $0x38] sm:$0xff]
    %v63 = vld [vmem:[%s4 + $0x40] sm:$0xff]
    %v64 = vld [vmem:[%s4 + $0x48] sm:$0xff]
    %v65 = vld [vmem:[%s4 + $0x50] sm:$0xff]
    %v66 = vld [vmem:[%s4 + $0x58] sm:$0xff]
    %v67 = vld [vmem:[%s4 + $0x60] sm:$0xff]
    %v68 = vld [vmem:[%s4 + $0x68] sm:$0xff]
    %v69 = vld [vmem:[%s4 + $0x70] sm:$0xff]
    %v70 = vld [vmem:[%s4 + $0x78] sm:$0xff]
    %v71 = vld [vmem:[%s1] sm:$0xff]
    %v72 = vld [vmem:[%s1 + $0x8] sm:$0xff]
    %v73 = vld [vmem:[%s1 + $0x10] sm:$0xff]
    %v74 = vld [vmem:[%s1 + $0x18] sm:$0xff]
    %v75 = vld [vmem:[%s1 + $0x20] sm:$0xff]
    %v76 = vld [vmem:[%s1 + $0x28] sm:$0xff]
    %v77 = vld [vmem:[%s1 + $0x30] sm:$0xff]
    %v78 = vld [vmem:[%s1 + $0x38] sm:$0xff]
    %v79 = vld [vmem:[%s1 + $0x40] sm:$0xff]
    %v80 = vld [vmem:[%s1 + $0x48] sm:$0xff]
    %v81 = vld [vmem:[%s1 + $0x50] sm:$0xff]
    %v82 = vld [vmem:[%s1 + $0x58] sm:$0xff]
    %v83 = vld [vmem:[%s1 + $0x60] sm:$0xff]
    %v84 = vld [vmem:[%s1 + $0x68] sm:$0xff]
    %v85 = vld [vmem:[%s1 + $0x70] sm:$0xff]
    %v86 = vld [vmem:[%s1 + $0x78] sm:$0xff]
    %88 = vset.pattern.permute.xlu0 0
    %89 = vperm.xlu0 %88, %v55
    %v90 = vpop.permute.xlu0 %89
    %93 = vset.pattern.permute.xlu0 0
    %94 = vperm.xlu0 %93, %v56
    %v95 = vpop.permute.xlu0 %94
    %98 = vset.pattern.permute.xlu0 0
    %99 = vperm.xlu0 %98, %v57
    %v100 = vpop.permute.xlu0 %99
    %103 = vset.pattern.permute.xlu0 0
    %104 = vperm.xlu0 %103, %v58
    %v105 = vpop.permute.xlu0 %104
    %108 = vset.pattern.permute.xlu0 0
    %109 = vperm.xlu0 %108, %v59
    %v110 = vpop.permute.xlu0 %109
    %113 = vset.pattern.permute.xlu0 0
    %114 = vperm.xlu0 %113, %v60
    %v115 = vpop.permute.xlu0 %114
    %118 = vset.pattern.permute.xlu0 0
    %119 = vperm.xlu0 %118, %v61
    %v120 = vpop.permute.xlu0 %119
    %123 = vset.pattern.permute.xlu0 0
    %124 = vperm.xlu0 %123, %v62
    %v125 = vpop.permute.xlu0 %124
    %128 = vset.pattern.permute.xlu0 0
    %129 = vperm.xlu0 %128, %v63
    %v130 = vpop.permute.xlu0 %129
    %133 = vset.pattern.permute.xlu0 0
    %134 = vperm.xlu0 %133, %v64
    %v135 = vpop.permute.xlu0 %134
    %138 = vset.pattern.permute.xlu0 0
    %139 = vperm.xlu0 %138, %v65
    %v140 = vpop.permute.xlu0 %139
    %143 = vset.pattern.permute.xlu0 0
    %144 = vperm.xlu0 %143, %v66
    %v145 = vpop.permute.xlu0 %144
    %148 = vset.pattern.permute.xlu0 0
    %149 = vperm.xlu0 %148, %v67
    %v150 = vpop.permute.xlu0 %149
    %153 = vset.pattern.permute.xlu0 0
    %154 = vperm.xlu0 %153, %v68
    %v155 = vpop.permute.xlu0 %154
    %158 = vset.pattern.permute.xlu0 0
    %159 = vperm.xlu0 %158, %v69
    %v160 = vpop.permute.xlu0 %159
    %163 = vset.pattern.permute.xlu0 0
    %164 = vperm.xlu0 %163, %v70
    %v165 = vpop.permute.xlu0 %164
    %v167 = vmul.f32 %v90, %v71
    %v168 = vmul.f32 %v95, %v72
    %v169 = vmul.f32 %v100, %v73
    %v170 = vmul.f32 %v105, %v74
    %v171 = vmul.f32 %v110, %v75
    %v172 = vmul.f32 %v115, %v76
    %v173 = vmul.f32 %v120, %v77
    %v174 = vmul.f32 %v125, %v78
    %v175 = vmul.f32 %v130, %v79
    %v176 = vmul.f32 %v135, %v80
    %v177 = vmul.f32 %v140, %v81
    %v178 = vmul.f32 %v145, %v82
    %v179 = vmul.f32 %v150, %v83
    %v180 = vmul.f32 %v155, %v84
    %v181 = vmul.f32 %v160, %v85
    %v182 = vmul.f32 %v165, %v86
    %v183 = vld [vmem:[%s0] sm:$0xff]
    %v184 = vld [vmem:[%s0 + $0x8] sm:$0xff]
    %v185 = vld [vmem:[%s0 + $0x10] sm:$0xff]
    %v186 = vld [vmem:[%s0 + $0x18] sm:$0xff]
    %v187 = vld [vmem:[%s0 + $0x20] sm:$0xff]
    %v188 = vld [vmem:[%s0 + $0x28] sm:$0xff]
    %v189 = vld [vmem:[%s0 + $0x30] sm:$0xff]
    %v190 = vld [vmem:[%s0 + $0x38] sm:$0xff]
    %v191 = vld [vmem:[%s0 + $0x40] sm:$0xff]
    %v192 = vld [vmem:[%s0 + $0x48] sm:$0xff]
    %v193 = vld [vmem:[%s0 + $0x50] sm:$0xff]
    %v194 = vld [vmem:[%s0 + $0x58] sm:$0xff]
    %v195 = vld [vmem:[%s0 + $0x60] sm:$0xff]
    %v196 = vld [vmem:[%s0 + $0x68] sm:$0xff]
    %v197 = vld [vmem:[%s0 + $0x70] sm:$0xff]
    %v198 = vld [vmem:[%s0 + $0x78] sm:$0xff]
    %v199 = vld [vmem:[#allocation2] sm:$0xff]
    %v200 = vld [vmem:[#allocation2 + $0x8] sm:$0xff]
    %v201 = vld [vmem:[#allocation2 + $0x10] sm:$0xff]
    %v202 = vld [vmem:[#allocation2 + $0x18] sm:$0xff]
    %v203 = vld [vmem:[#allocation2 + $0x20] sm:$0xff]
    %v204 = vld [vmem:[#allocation2 + $0x28] sm:$0xff]
    %v205 = vld [vmem:[#allocation2 + $0x30] sm:$0xff]
    %v206 = vld [vmem:[#allocation2 + $0x38] sm:$0xff]
    %v207 = vld [vmem:[#allocation2 + $0x40] sm:$0xff]
    %v208 = vld [vmem:[#allocation2 + $0x48] sm:$0xff]
    %v209 = vld [vmem:[#allocation2 + $0x50] sm:$0xff]
    %v210 = vld [vmem:[#allocation2 + $0x58] sm:$0xff]
    %v211 = vld [vmem:[#allocation2 + $0x60] sm:$0xff]
    %v212 = vld [vmem:[#allocation2 + $0x68] sm:$0xff]
    %v213 = vld [vmem:[#allocation2 + $0x70] sm:$0xff]
    %v214 = vld [vmem:[#allocation2 + $0x78] sm:$0xff]
    %215 = vmatprep.subr.mxu0 0.0
    %216 = vmatpush1.msra.mxu0 %v182
    %217 = vmatprep.subr.mxu0 0.0
    %218 = vmatpush1.msra.mxu0 %v181
    %219 = vmatprep.subr.mxu0 0.0
    %220 = vmatpush1.msra.mxu0 %v180
    %221 = vmatprep.subr.mxu0 0.0
    %222 = vmatpush1.msra.mxu0 %v179
    %223 = vmatprep.subr.mxu0 0.0
    %224 = vmatpush1.msra.mxu0 %v178
    %225 = vmatprep.subr.mxu0 0.0
    %226 = vmatpush1.msra.mxu0 %v177
    %227 = vmatprep.subr.mxu0 0.0
    %228 = vmatpush1.msra.mxu0 %v176
    %229 = vmatprep.subr.mxu0 0.0
    %230 = vmatpush1.msra.mxu0 %v175
    %231 = vmatprep.subr.mxu0 0.0
    %232 = vmatpush1.msra.mxu0 %v174
    %233 = vmatprep.subr.mxu0 0.0
    %234 = vmatpush1.msra.mxu0 %v173
    %235 = vmatprep.subr.mxu0 0.0
    %236 = vmatpush1.msra.mxu0 %v172
    %237 = vmatprep.subr.mxu0 0.0
    %238 = vmatpush1.msra.mxu0 %v171
    %239 = vmatprep.subr.mxu0 0.0
    %240 = vmatpush1.msra.mxu0 %v170
    %241 = vmatprep.subr.mxu0 0.0
    %242 = vmatpush1.msra.mxu0 %v169
    %243 = vmatprep.subr.mxu0 0.0
    %244 = vmatpush1.msra.mxu0 %v168
    %245 = vmatprep.subr.mxu0 0.0
    %246 = vmatpush1.msra.mxu0 %v167
    %247 = vmatprep.subr.mxu0 0.0
    %248 = vmatpush2.msra.mxu0 0.0
    %249 = vmatprep.subr.mxu0 0.0
    %250 = vmatpush2.msra.mxu0 0.0
    %251 = vmatprep.subr.mxu0 0.0
    %252 = vmatpush2.msra.mxu0 0.0
    %253 = vmatprep.subr.mxu0 0.0
    %254 = vmatpush2.msra.mxu0 0.0
    %255 = vmatprep.subr.mxu0 0.0
    %256 = vmatpush2.msra.mxu0 0.0
    %257 = vmatprep.subr.mxu0 0.0
    %258 = vmatpush2.msra.mxu0 0.0
    %259 = vmatprep.subr.mxu0 0.0
    %260 = vmatpush2.msra.mxu0 0.0
    %261 = vmatprep.subr.mxu0 0.0
    %262 = vmatpush2.msra.mxu0 0.0
    %263 = vmatprep.subr.mxu0 0.0
    %264 = vmatpush2.msra.mxu0 0.0
    %265 = vmatprep.subr.mxu0 0.0
    %266 = vmatpush2.msra.mxu0 0.0
    %267 = vmatprep.subr.mxu0 0.0
    %268 = vmatpush2.msra.mxu0 0.0
    %269 = vmatprep.subr.mxu0 0.0
    %270 = vmatpush2.msra.mxu0 0.0
    %271 = vmatprep.subr.mxu0 0.0
    %272 = vmatpush2.msra.mxu0 0.0
    %273 = vmatprep.subr.mxu0 0.0
    %274 = vmatpush2.msra.mxu0 0.0
    %275 = vmatprep.subr.mxu0 0.0
    %276 = vmatpush2.msra.mxu0 0.0
    %277 = vmatprep.subr.mxu0 0.0
    %278 = vmatpush2.msra.mxu0 0.0
    %279 = vmatprep.mubr.f32.mxu0 0.0
    %280 = vmatmul.mubr.f32.gmra.mxu0 %v183
    %v281 = vpop.f32.mrf.mxu0
    %v282 = vadd.f32 0.0, %v281
    %v283 = vpop.f32.mrf.mxu0
    %284 = vmatprep.mubr.f32.mxu0 0.0
    %285 = vmatmul.mubr.f32.gmra.mxu0 %v184
    %v286 = vpop.f32.mrf.mxu0
    %v287 = vadd.f32 0.0, %v286
    %v288 = vpop.f32.mrf.mxu0
    %289 = vmatprep.mubr.f32.mxu0 0.0
    %290 = vmatmul.mubr.f32.gmra.mxu0 %v185
    %v291 = vpop.f32.mrf.mxu0
    %v292 = vadd.f32 0.0, %v291
    %v293 = vpop.f32.mrf.mxu0
    %294 = vmatprep.mubr.f32.mxu0 0.0
    %295 = vmatmul.mubr.f32.gmra.mxu0 %v186
    %v296 = vpop.f32.mrf.mxu0
    %v297 = vadd.f32 0.0, %v296
    %v298 = vpop.f32.mrf.mxu0
    %299 = vmatprep.mubr.f32.mxu0 0.0
    %300 = vmatmul.mubr.f32.gmra.mxu0 %v187
    %v301 = vpop.f32.mrf.mxu0
    %v302 = vadd.f32 0.0, %v301
    %v303 = vpop.f32.mrf.mxu0
    %304 = vmatprep.mubr.f32.mxu0 0.0
    %305 = vmatmul.mubr.f32.gmra.mxu0 %v188
    %v306 = vpop.f32.mrf.mxu0
    %v307 = vadd.f32 0.0, %v306
    %v308 = vpop.f32.mrf.mxu0
    %309 = vmatprep.mubr.f32.mxu0 0.0
    %310 = vmatmul.mubr.f32.gmra.mxu0 %v189
    %v311 = vpop.f32.mrf.mxu0
    %v312 = vadd.f32 0.0, %v311
    %v313 = vpop.f32.mrf.mxu0
    %314 = vmatprep.mubr.f32.mxu0 0.0
    %315 = vmatmul.mubr.f32.gmra.mxu0 %v190
    %v316 = vpop.f32.mrf.mxu0
    %v317 = vadd.f32 0.0, %v316
    %v318 = vpop.f32.mrf.mxu0
    %319 = vmatprep.mubr.f32.mxu0 0.0
    %320 = vmatmul.mubr.f32.gmra.mxu0 %v191
    %v321 = vpop.f32.mrf.mxu0
    %v322 = vadd.f32 0.0, %v321
    %v323 = vpop.f32.mrf.mxu0
    %324 = vmatprep.mubr.f32.mxu0 0.0
    %325 = vmatmul.mubr.f32.gmra.mxu0 %v192
    %v326 = vpop.f32.mrf.mxu0
    %v327 = vadd.f32 0.0, %v326
    %v328 = vpop.f32.mrf.mxu0
    %329 = vmatprep.mubr.f32.mxu0 0.0
    %330 = vmatmul.mubr.f32.gmra.mxu0 %v193
    %v331 = vpop.f32.mrf.mxu0
    %v332 = vadd.f32 0.0, %v331
    %v333 = vpop.f32.mrf.mxu0
    %334 = vmatprep.mubr.f32.mxu0 0.0
    %335 = vmatmul.mubr.f32.gmra.mxu0 %v194
    %v336 = vpop.f32.mrf.mxu0
    %v337 = vadd.f32 0.0, %v336
    %v338 = vpop.f32.mrf.mxu0
    %339 = vmatprep.mubr.f32.mxu0 0.0
    %340 = vmatmul.mubr.f32.gmra.mxu0 %v195
    %v341 = vpop.f32.mrf.mxu0
    %v342 = vadd.f32 0.0, %v341
    %v343 = vpop.f32.mrf.mxu0
    %344 = vmatprep.mubr.f32.mxu0 0.0
    %345 = vmatmul.mubr.f32.gmra.mxu0 %v196
    %v346 = vpop.f32.mrf.mxu0
    %v347 = vadd.f32 0.0, %v346
    %v348 = vpop.f32.mrf.mxu0
    %349 = vmatprep.mubr.f32.mxu0 0.0
    %350 = vmatmul.mubr.f32.gmra.mxu0 %v197
    %v351 = vpop.f32.mrf.mxu0
    %v352 = vadd.f32 0.0, %v351
    %v353 = vpop.f32.mrf.mxu0
    %354 = vmatprep.mubr.f32.mxu0 0.0
    %355 = vmatmul.mubr.f32.gmra.mxu0 %v198
    %v356 = vpop.f32.mrf.mxu0
    %v357 = vadd.f32 0.0, %v356
    %v358 = vpop.f32.mrf.mxu0
    %359 = vdwg.mxu0
    %v360 = vadd.f32 %v199, %v282
    %v361 = vadd.f32 %v200, %v287
    %v362 = vadd.f32 %v201, %v292
    %v363 = vadd.f32 %v202, %v297
    %v364 = vadd.f32 %v203, %v302
    %v365 = vadd.f32 %v204, %v307
    %v366 = vadd.f32 %v205, %v312
    %v367 = vadd.f32 %v206, %v317
    %v368 = vadd.f32 %v207, %v322
    %v369 = vadd.f32 %v208, %v327
    %v370 = vadd.f32 %v209, %v332
    %v371 = vadd.f32 %v210, %v337
    %v372 = vadd.f32 %v211, %v342
    %v373 = vadd.f32 %v212, %v347
    %v374 = vadd.f32 %v213, %v352
    %v375 = vadd.f32 %v214, %v357
    %376 = vst [vmem:[#allocation2] sm:$0xff] %v360
    %377 = vst [vmem:[#allocation2 + $0x8] sm:$0xff] %v361
    %378 = vst [vmem:[#allocation2 + $0x10] sm:$0xff] %v362
    %379 = vst [vmem:[#allocation2 + $0x18] sm:$0xff] %v363
    %380 = vst [vmem:[#allocation2 + $0x20] sm:$0xff] %v364
    %381 = vst [vmem:[#allocation2 + $0x28] sm:$0xff] %v365
    %382 = vst [vmem:[#allocation2 + $0x30] sm:$0xff] %v366
    %383 = vst [vmem:[#allocation2 + $0x38] sm:$0xff] %v367
    %384 = vst [vmem:[#allocation2 + $0x40] sm:$0xff] %v368
    %385 = vst [vmem:[#allocation2 + $0x48] sm:$0xff] %v369
    %386 = vst [vmem:[#allocation2 + $0x50] sm:$0xff] %v370
    %387 = vst [vmem:[#allocation2 + $0x58] sm:$0xff] %v371
    %388 = vst [vmem:[#allocation2 + $0x60] sm:$0xff] %v372
    %389 = vst [vmem:[#allocation2 + $0x68] sm:$0xff] %v373
    %390 = vst [vmem:[#allocation2 + $0x70] sm:$0xff] %v374
    %391 = vst [vmem:[#allocation2 + $0x78] sm:$0xff] %v375
    // Predicated region
    $region30: #{tpu_custom_call.1} parent=1 // pred_check
      %p392 = pneg %p35
    $region31: #{tpu_custom_call.1} parent=1 // pred_check_branch
      %394 = sbr.rel (%p392) target = $region33
    $region32: #{tpu_custom_call.1} parent=1 // pred_region
      %v395 = vld [vmem:[%s3] sm:$0xff]
      %v396 = vld [vmem:[%s3 + $0x8] sm:$0xff]
      %v397 = vld [vmem:[%s3 + $0x10] sm:$0xff]
      %v398 = vld [vmem:[%s3 + $0x18] sm:$0xff]
      %v399 = vld [vmem:[%s3 + $0x20] sm:$0xff]
      %v400 = vld [vmem:[%s3 + $0x28] sm:$0xff]
      %v401 = vld [vmem:[%s3 + $0x30] sm:$0xff]
      %v402 = vld [vmem:[%s3 + $0x38] sm:$0xff]
      %v403 = vld [vmem:[%s3 + $0x40] sm:$0xff]
      %v404 = vld [vmem:[%s3 + $0x48] sm:$0xff]
      %v405 = vld [vmem:[%s3 + $0x50] sm:$0xff]
      %v406 = vld [vmem:[%s3 + $0x58] sm:$0xff]
      %v407 = vld [vmem:[%s3 + $0x60] sm:$0xff]
      %v408 = vld [vmem:[%s3 + $0x68] sm:$0xff]
      %v409 = vld [vmem:[%s3 + $0x70] sm:$0xff]
      %v410 = vld [vmem:[%s3 + $0x78] sm:$0xff]
      %v411 = vld [vmem:[#allocation2] sm:$0xff]
      %v412 = vld [vmem:[#allocation2 + $0x8] sm:$0xff]
      %v413 = vld [vmem:[#allocation2 + $0x10] sm:$0xff]
      %v414 = vld [vmem:[#allocation2 + $0x18] sm:$0xff]
      %v415 = vld [vmem:[#allocation2 + $0x20] sm:$0xff]
      %v416 = vld [vmem:[#allocation2 + $0x28] sm:$0xff]
      %v417 = vld [vmem:[#allocation2 + $0x30] sm:$0xff]
      %v418 = vld [vmem:[#allocation2 + $0x38] sm:$0xff]
      %v419 = vld [vmem:[#allocation2 + $0x40] sm:$0xff]
      %v420 = vld [vmem:[#allocation2 + $0x48] sm:$0xff]
      %v421 = vld [vmem:[#allocation2 + $0x50] sm:$0xff]
      %v422 = vld [vmem:[#allocation2 + $0x58] sm:$0xff]
      %v423 = vld [vmem:[#allocation2 + $0x60] sm:$0xff]
      %v424 = vld [vmem:[#allocation2 + $0x68] sm:$0xff]
      %v425 = vld [vmem:[#allocation2 + $0x70] sm:$0xff]
      %v426 = vld [vmem:[#allocation2 + $0x78] sm:$0xff]
      %428 = vset.pattern.permute.xlu0 0
      %429 = vperm.xlu0 %428, %v395
      %v430 = vpop.permute.xlu0 %429
      %433 = vset.pattern.permute.xlu0 0
      %434 = vperm.xlu0 %433, %v396
      %v435 = vpop.permute.xlu0 %434
      %438 = vset.pattern.permute.xlu0 0
      %439 = vperm.xlu0 %438, %v397
      %v440 = vpop.permute.xlu0 %439
      %443 = vset.pattern.permute.xlu0 0
      %444 = vperm.xlu0 %443, %v398
      %v445 = vpop.permute.xlu0 %444
      %448 = vset.pattern.permute.xlu0 0
      %449 = vperm.xlu0 %448, %v399
      %v450 = vpop.permute.xlu0 %449
      %453 = vset.pattern.permute.xlu0 0
      %454 = vperm.xlu0 %453, %v400
      %v455 = vpop.permute.xlu0 %454
      %458 = vset.pattern.permute.xlu0 0
      %459 = vperm.xlu0 %458, %v401
      %v460 = vpop.permute.xlu0 %459
      %463 = vset.pattern.permute.xlu0 0
      %464 = vperm.xlu0 %463, %v402
      %v465 = vpop.permute.xlu0 %464
      %468 = vset.pattern.permute.xlu0 0
      %469 = vperm.xlu0 %468, %v403
      %v470 = vpop.permute.xlu0 %469
      %473 = vset.pattern.permute.xlu0 0
      %474 = vperm.xlu0 %473, %v404
      %v475 = vpop.permute.xlu0 %474
      %478 = vset.pattern.permute.xlu0 0
      %479 = vperm.xlu0 %478, %v405
      %v480 = vpop.permute.xlu0 %479
      %483 = vset.pattern.permute.xlu0 0
      %484 = vperm.xlu0 %483, %v406
      %v485 = vpop.permute.xlu0 %484
      %488 = vset.pattern.permute.xlu0 0
      %489 = vperm.xlu0 %488, %v407
      %v490 = vpop.permute.xlu0 %489
      %493 = vset.pattern.permute.xlu0 0
      %494 = vperm.xlu0 %493, %v408
      %v495 = vpop.permute.xlu0 %494
      %498 = vset.pattern.permute.xlu0 0
      %499 = vperm.xlu0 %498, %v409
      %v500 = vpop.permute.xlu0 %499
      %503 = vset.pattern.permute.xlu0 0
      %504 = vperm.xlu0 %503, %v410
      %v505 = vpop.permute.xlu0 %504
      %v507 = vmul.f32 %v430, %v411
      %v508 = vmul.f32 %v435, %v412
      %v509 = vmul.f32 %v440, %v413
      %v510 = vmul.f32 %v445, %v414
      %v511 = vmul.f32 %v450, %v415
      %v512 = vmul.f32 %v455, %v416
      %v513 = vmul.f32 %v460, %v417
      %v514 = vmul.f32 %v465, %v418
      %v515 = vmul.f32 %v470, %v419
      %v516 = vmul.f32 %v475, %v420
      %v517 = vmul.f32 %v480, %v421
      %v518 = vmul.f32 %v485, %v422
      %v519 = vmul.f32 %v490, %v423
      %v520 = vmul.f32 %v495, %v424
      %v521 = vmul.f32 %v500, %v425
      %v522 = vmul.f32 %v505, %v426
      %v523 = vld [vmem:[#allocation3] sm:$0xff]
      %v524 = vld [vmem:[#allocation3 + $0x8] sm:$0xff]
      %v525 = vld [vmem:[#allocation3 + $0x10] sm:$0xff]
      %v526 = vld [vmem:[#allocation3 + $0x18] sm:$0xff]
      %v527 = vld [vmem:[#allocation3 + $0x20] sm:$0xff]
      %v528 = vld [vmem:[#allocation3 + $0x28] sm:$0xff]
      %v529 = vld [vmem:[#allocation3 + $0x30] sm:$0xff]
      %v530 = vld [vmem:[#allocation3 + $0x38] sm:$0xff]
      %v531 = vld [vmem:[#allocation3 + $0x40] sm:$0xff]
      %v532 = vld [vmem:[#allocation3 + $0x48] sm:$0xff]
      %v533 = vld [vmem:[#allocation3 + $0x50] sm:$0xff]
      %v534 = vld [vmem:[#allocation3 + $0x58] sm:$0xff]
      %v535 = vld [vmem:[#allocation3 + $0x60] sm:$0xff]
      %v536 = vld [vmem:[#allocation3 + $0x68] sm:$0xff]
      %v537 = vld [vmem:[#allocation3 + $0x70] sm:$0xff]
      %v538 = vld [vmem:[#allocation3 + $0x78] sm:$0xff]
      %539 = vmatprep.subr.mxu0 0.0
      %540 = vmatpush1.msra.mxu0 %v538
      %541 = vmatprep.subr.mxu0 0.0
      %542 = vmatpush1.msra.mxu0 %v537
      %543 = vmatprep.subr.mxu0 0.0
      %544 = vmatpush1.msra.mxu0 %v536
      %545 = vmatprep.subr.mxu0 0.0
      %546 = vmatpush1.msra.mxu0 %v535
      %547 = vmatprep.subr.mxu0 0.0
      %548 = vmatpush1.msra.mxu0 %v534
      %549 = vmatprep.subr.mxu0 0.0
      %550 = vmatpush1.msra.mxu0 %v533
      %551 = vmatprep.subr.mxu0 0.0
      %552 = vmatpush1.msra.mxu0 %v532
      %553 = vmatprep.subr.mxu0 0.0
      %554 = vmatpush1.msra.mxu0 %v531
      %555 = vmatprep.subr.mxu0 0.0
      %556 = vmatpush1.msra.mxu0 %v530
      %557 = vmatprep.subr.mxu0 0.0
      %558 = vmatpush1.msra.mxu0 %v529
      %559 = vmatprep.subr.mxu0 0.0
      %560 = vmatpush1.msra.mxu0 %v528
      %561 = vmatprep.subr.mxu0 0.0
      %562 = vmatpush1.msra.mxu0 %v527
      %563 = vmatprep.subr.mxu0 0.0
      %564 = vmatpush1.msra.mxu0 %v526
      %565 = vmatprep.subr.mxu0 0.0
      %566 = vmatpush1.msra.mxu0 %v525
      %567 = vmatprep.subr.mxu0 0.0
      %568 = vmatpush1.msra.mxu0 %v524
      %569 = vmatprep.subr.mxu0 0.0
      %570 = vmatpush1.msra.mxu0 %v523
      %571 = vmatprep.subr.mxu0 0.0
      %572 = vmatpush2.msra.mxu0 0.0
      %573 = vmatprep.subr.mxu0 0.0
      %574 = vmatpush2.msra.mxu0 0.0
      %575 = vmatprep.subr.mxu0 0.0
      %576 = vmatpush2.msra.mxu0 0.0
      %577 = vmatprep.subr.mxu0 0.0
      %578 = vmatpush2.msra.mxu0 0.0
      %579 = vmatprep.subr.mxu0 0.0
      %580 = vmatpush2.msra.mxu0 0.0
      %581 = vmatprep.subr.mxu0 0.0
      %582 = vmatpush2.msra.mxu0 0.0
      %583 = vmatprep.subr.mxu0 0.0
      %584 = vmatpush2.msra.mxu0 0.0
      %585 = vmatprep.subr.mxu0 0.0
      %586 = vmatpush2.msra.mxu0 0.0
      %587 = vmatprep.subr.mxu0 0.0
      %588 = vmatpush2.msra.mxu0 0.0
      %589 = vmatprep.subr.mxu0 0.0
      %590 = vmatpush2.msra.mxu0 0.0
      %591 = vmatprep.subr.mxu0 0.0
      %592 = vmatpush2.msra.mxu0 0.0
      %593 = vmatprep.subr.mxu0 0.0
      %594 = vmatpush2.msra.mxu0 0.0
      %595 = vmatprep.subr.mxu0 0.0
      %596 = vmatpush2.msra.mxu0 0.0
      %597 = vmatprep.subr.mxu0 0.0
      %598 = vmatpush2.msra.mxu0 0.0
      %599 = vmatprep.subr.mxu0 0.0
      %600 = vmatpush2.msra.mxu0 0.0
      %601 = vmatprep.subr.mxu0 0.0
      %602 = vmatpush2.msra.mxu0 0.0
      %603 = vmatprep.mubr.f32.mxu0 0.0
      %604 = vmatmul.mubr.f32.gmra.mxu0 %v507
      %v605 = vpop.f32.mrf.mxu0
      %v606 = vadd.f32 0.0, %v605
      %v607 = vpop.f32.mrf.mxu0
      %608 = vmatprep.mubr.f32.mxu0 0.0
      %609 = vmatmul.mubr.f32.gmra.mxu0 %v508
      %v610 = vpop.f32.mrf.mxu0
      %v611 = vadd.f32 0.0, %v610
      %v612 = vpop.f32.mrf.mxu0
      %613 = vmatprep.mubr.f32.mxu0 0.0
      %614 = vmatmul.mubr.f32.gmra.mxu0 %v509
      %v615 = vpop.f32.mrf.mxu0
      %v616 = vadd.f32 0.0, %v615
      %v617 = vpop.f32.mrf.mxu0
      %618 = vmatprep.mubr.f32.mxu0 0.0
      %619 = vmatmul.mubr.f32.gmra.mxu0 %v510
      %v620 = vpop.f32.mrf.mxu0
      %v621 = vadd.f32 0.0, %v620
      %v622 = vpop.f32.mrf.mxu0
      %623 = vmatprep.mubr.f32.mxu0 0.0
      %624 = vmatmul.mubr.f32.gmra.mxu0 %v511
      %v625 = vpop.f32.mrf.mxu0
      %v626 = vadd.f32 0.0, %v625
      %v627 = vpop.f32.mrf.mxu0
      %628 = vmatprep.mubr.f32.mxu0 0.0
      %629 = vmatmul.mubr.f32.gmra.mxu0 %v512
      %v630 = vpop.f32.mrf.mxu0
      %v631 = vadd.f32 0.0, %v630
      %v632 = vpop.f32.mrf.mxu0
      %633 = vmatprep.mubr.f32.mxu0 0.0
      %634 = vmatmul.mubr.f32.gmra.mxu0 %v513
      %v635 = vpop.f32.mrf.mxu0
      %v636 = vadd.f32 0.0, %v635
      %v637 = vpop.f32.mrf.mxu0
      %638 = vmatprep.mubr.f32.mxu0 0.0
      %639 = vmatmul.mubr.f32.gmra.mxu0 %v514
      %v640 = vpop.f32.mrf.mxu0
      %v641 = vadd.f32 0.0, %v640
      %v642 = vpop.f32.mrf.mxu0
      %643 = vmatprep.mubr.f32.mxu0 0.0
      %644 = vmatmul.mubr.f32.gmra.mxu0 %v515
      %v645 = vpop.f32.mrf.mxu0
      %v646 = vadd.f32 0.0, %v645
      %v647 = vpop.f32.mrf.mxu0
      %648 = vmatprep.mubr.f32.mxu0 0.0
      %649 = vmatmul.mubr.f32.gmra.mxu0 %v516
      %v650 = vpop.f32.mrf.mxu0
      %v651 = vadd.f32 0.0, %v650
      %v652 = vpop.f32.mrf.mxu0
      %653 = vmatprep.mubr.f32.mxu0 0.0
      %654 = vmatmul.mubr.f32.gmra.mxu0 %v517
      %v655 = vpop.f32.mrf.mxu0
      %v656 = vadd.f32 0.0, %v655
      %v657 = vpop.f32.mrf.mxu0
      %658 = vmatprep.mubr.f32.mxu0 0.0
      %659 = vmatmul.mubr.f32.gmra.mxu0 %v518
      %v660 = vpop.f32.mrf.mxu0
      %v661 = vadd.f32 0.0, %v660
      %v662 = vpop.f32.mrf.mxu0
      %663 = vmatprep.mubr.f32.mxu0 0.0
      %664 = vmatmul.mubr.f32.gmra.mxu0 %v519
      %v665 = vpop.f32.mrf.mxu0
      %v666 = vadd.f32 0.0, %v665
      %v667 = vpop.f32.mrf.mxu0
      %668 = vmatprep.mubr.f32.mxu0 0.0
      %669 = vmatmul.mubr.f32.gmra.mxu0 %v520
      %v670 = vpop.f32.mrf.mxu0
      %v671 = vadd.f32 0.0, %v670
      %v672 = vpop.f32.mrf.mxu0
      %673 = vmatprep.mubr.f32.mxu0 0.0
      %674 = vmatmul.mubr.f32.gmra.mxu0 %v521
      %v675 = vpop.f32.mrf.mxu0
      %v676 = vadd.f32 0.0, %v675
      %v677 = vpop.f32.mrf.mxu0
      %678 = vmatprep.mubr.f32.mxu0 0.0
      %679 = vmatmul.mubr.f32.gmra.mxu0 %v522
      %v680 = vpop.f32.mrf.mxu0
      %v681 = vadd.f32 0.0, %v680
      %v682 = vpop.f32.mrf.mxu0
      %683 = vdwg.mxu0
      %684 = vst [vmem:[#allocation6] sm:$0xff] %v606
      %685 = vst [vmem:[#allocation6 + $0x8] sm:$0xff] %v611
      %686 = vst [vmem:[#allocation6 + $0x10] sm:$0xff] %v616
      %687 = vst [vmem:[#allocation6 + $0x18] sm:$0xff] %v621
      %688 = vst [vmem:[#allocation6 + $0x20] sm:$0xff] %v626
      %689 = vst [vmem:[#allocation6 + $0x28] sm:$0xff] %v631
      %690 = vst [vmem:[#allocation6 + $0x30] sm:$0xff] %v636
      %691 = vst [vmem:[#allocation6 + $0x38] sm:$0xff] %v641
      %692 = vst [vmem:[#allocation6 + $0x40] sm:$0xff] %v646
      %693 = vst [vmem:[#allocation6 + $0x48] sm:$0xff] %v651
      %694 = vst [vmem:[#allocation6 + $0x50] sm:$0xff] %v656
      %695 = vst [vmem:[#allocation6 + $0x58] sm:$0xff] %v661
      %696 = vst [vmem:[#allocation6 + $0x60] sm:$0xff] %v666
      %697 = vst [vmem:[#allocation6 + $0x68] sm:$0xff] %v671
      %698 = vst [vmem:[#allocation6 + $0x70] sm:$0xff] %v676
      %699 = vst [vmem:[#allocation6 + $0x78] sm:$0xff] %v681
    $region33: #{tpu_custom_call.1} parent=1 // pred_fallthru
      _
    // Predicated region
    $region34: #{tpu_custom_call.1} parent=1 // pred_check
      _
    $region35: #{tpu_custom_call.1} parent=1 // pred_check_branch
      %701 = sbr.rel (0) target = $region37
    $region36: #{tpu_custom_call.1} parent=1 // pred_region
      %s703 = ssub.s32 2048, 2048
      %704 = vsyncadd [#allocation5], %s703
      %s705 = sshll.u32 [#allocation6], 4
      %s706 = int_to_ptr.vmem [resolvable:$true] %s705
      %711 = dma.vmem_to_hbm [thread:$0]  %s706, 2048, %s5, [#allocation5], 128, 128, 8
    $region37: #{tpu_custom_call.1} parent=1 // pred_fallthru
      _
    // Predicated region
    $region38: #{tpu_custom_call.1} parent=1 // pred_check
      _
    $region39: #{tpu_custom_call.1} parent=1 // pred_check_branch
      %713 = sbr.rel (0) target = $region41
    $region40: #{tpu_custom_call.1} parent=1 // pred_region
      %714 = dma.done [#allocation5], 2048
    $region41: #{tpu_custom_call.1} parent=1 // pred_fallthru
      _
    %715 = vsyncpa [#allocation4], 1
    %716 = vsyncpa [#allocation5], 1

</llo_original>
